<compile_context>
chip_gen: v7x
topology: tpu7x:2x2x1
jax: 0.10.0
libtpu: 0.0.40
codegen_flags: <defaults>
</compile_context>

<pallas_src>
import jax
import jax.numpy as jnp
from jax.experimental import pallas as pl
from jax.experimental.pallas import tpu as pltpu

STATE_DIM = 25
ACTION_DIM = 5
MAX_ACTION = 5.0          # Python float: baked into the kernel, not captured
HID1 = 64
HID2 = 32

MIN_TILE_B = 8            # sublane granularity
TILE_B_MAX = 2048         # batch rows per grid step for large batches


def _round_up(x, m):
    return ((x + m - 1) // m) * m


def actor_kernel(x_ref, w1_ref, b1_ref, w2_ref, b2_ref, w3_ref, b3_ref,
                 out_ref):
    x = x_ref[...]                                             # (tile_b, 25) f32

    # fc1 + relu
    h1 = jnp.dot(x, w1_ref[...], preferred_element_type=jnp.float32)
    h1 = jnp.maximum(h1 + b1_ref[...], 0.0)                    # (tile_b, 64)

    # fc2 + relu
    h2 = jnp.dot(h1, w2_ref[...], preferred_element_type=jnp.float32)
    h2 = jnp.maximum(h2 + b2_ref[...], 0.0)                    # (tile_b, 32)

    # fc3 + tanh * max_action
    h3 = jnp.dot(h2, w3_ref[...], preferred_element_type=jnp.float32)
    a = jnp.tanh(h3 + b3_ref[...]) * MAX_ACTION                # (tile_b, 5)

    # softmax over the 5 real action lanes
    m = jnp.max(a, axis=-1, keepdims=True)
    e = jnp.exp(a - m)
    out_ref[...] = (e / jnp.sum(e, axis=-1, keepdims=True)).astype(out_ref.dtype)


def _choose_tiling(B):
    ntiles = pl.cdiv(B, TILE_B_MAX)
    # v7x: ensure >= 2 grid steps so both TensorCores get work (harmless on
    # single-TC v5e/v6e); only when the batch actually spans >= 2 min tiles.
    if ntiles < 2 and B >= 2 * MIN_TILE_B:
        ntiles = 2
    tile_b = _round_up(pl.cdiv(B, ntiles), MIN_TILE_B)
    return tile_b, ntiles


def actor_forward(state, params):
    w1, b1, w2, b2, w3, b3 = params
    B = state.shape[0]
    tile_b, ntiles = _choose_tiling(B)
    B_pad = tile_b * ntiles

    x = state.astype(jnp.float32)
    if B_pad != B:
        x = jnp.pad(x, ((0, B_pad - B), (0, 0)))   # dead rows, sliced off below

    const = lambda shape: pl.BlockSpec(shape, lambda i: (0, 0))

    out = pl.pallas_call(
        actor_kernel,
        out_shape=jax.ShapeDtypeStruct((B_pad, ACTION_DIM), jnp.float32),
        grid=(ntiles,),
        in_specs=[
            pl.BlockSpec((tile_b, STATE_DIM), lambda i: (i, 0)),   # state tile
            const((STATE_DIM, HID1)),                              # w1
            const((1, HID1)),                                      # b1
            const((HID1, HID2)),                                   # w2
            const((1, HID2)),                                      # b2
            const((HID2, ACTION_DIM)),                             # w3
            const((1, ACTION_DIM)),                                # b3
        ],
        out_specs=pl.BlockSpec((tile_b, ACTION_DIM), lambda i: (i, 0)),
        compiler_params=pltpu.CompilerParams(
            dimension_semantics=("parallel",),
            vmem_limit_bytes=32 * 1024 * 1024,
        ),
    )(x, w1, b1, w2, b2, w3, b3)

    return out[:B] if B_pad != B else out


def init_params(key):
    """Deterministic synthetic init (torch Linear style: U(-1/sqrt(fan_in), +))."""
    ks = jax.random.split(key, 6)

    def lin(kw, kb, fan_in, fan_out):
        bound = 1.0 / float(fan_in) ** 0.5
        # stored as (in, out) so the kernel computes x @ W + b
        w = jax.random.uniform(kw, (fan_in, fan_out), jnp.float32, -bound, bound)
        b = jax.random.uniform(kb, (1, fan_out), jnp.float32, -bound, bound)
        return w, b

    w1, b1 = lin(ks[0], ks[1], STATE_DIM, HID1)
    w2, b2 = lin(ks[2], ks[3], HID1, HID2)
    w3, b3 = lin(ks[4], ks[5], HID2, ACTION_DIM)
    return (w1, b1, w2, b2, w3, b3)


def actor_ref(state, params):
    """Pure-JAX reference (full f32 matmul precision for a tight comparison)."""
    hi = jax.lax.Precision.HIGHEST
    w1, b1, w2, b2, w3, b3 = params
    a = jnp.maximum(jnp.dot(state, w1, precision=hi) + b1, 0.0)
    a = jnp.maximum(jnp.dot(a, w2, precision=hi) + b2, 0.0)
    a = jnp.tanh(jnp.dot(a, w3, precision=hi) + b3) * MAX_ACTION
    return jax.nn.softmax(a, axis=1)


if __name__ == "__main__":
    key = jax.random.PRNGKey(0)
    k_state, k_state2, k_params = jax.random.split(key, 3)

    params = init_params(k_params)

    # Small, sublane-aligned batch (single grid step).
    B = 8
    state = jax.random.normal(k_state, (B, STATE_DIM), jnp.float32)
    out = jax.block_until_ready(actor_forward(state, params))
    ref = actor_ref(state, params)
    assert out.shape == (B, ACTION_DIM)
    assert jnp.allclose(out, ref, atol=1e-5, rtol=1e-5), "mismatch vs reference (B=8)"
    assert jnp.allclose(jnp.sum(out, axis=1), 1.0, atol=1e-5), "softmax rows must sum to 1"

    # Non-aligned batch: exercises batch padding + the 2-step grid split.
    B2 = 50
    state2 = jax.random.normal(k_state2, (B2, STATE_DIM), jnp.float32)
    out2 = jax.block_until_ready(actor_forward(state2, params))
    ref2 = actor_ref(state2, params)
    assert out2.shape == (B2, ACTION_DIM)
    assert jnp.allclose(out2, ref2, atol=1e-5, rtol=1e-5), "mismatch vs reference (B=50)"
    assert jnp.allclose(jnp.sum(out2, axis=1), 1.0, atol=1e-5), "softmax rows must sum to 1"

    print("KERNEL_OK")
</pallas_src>

<mosaic_0001>
module attributes {stable_mosaic.version = 11 : i64} {
  func.func @actor_kernel(%arg0: i32, %arg1: memref<8x25xf32, #tpu.memory_space<vmem>>, %arg2: memref<25x64xf32, #tpu.memory_space<vmem>>, %arg3: memref<1x64xf32, #tpu.memory_space<vmem>>, %arg4: memref<64x32xf32, #tpu.memory_space<vmem>>, %arg5: memref<1x32xf32, #tpu.memory_space<vmem>>, %arg6: memref<32x5xf32, #tpu.memory_space<vmem>>, %arg7: memref<1x5xf32, #tpu.memory_space<vmem>>, %arg8: memref<8x5xf32, #tpu.memory_space<vmem>>) attributes {dimension_semantics = [#tpu.dimension_semantics<parallel>], iteration_bounds = array<i64: 1>, scalar_prefetch = 0 : i64, scratch_operands = 0 : i64, tpu.core_type = #tpu.core_type<tc>, window_params = [{transform_indices = @transform_0, window_bounds = array<i64: 8, 25>}, {pipeline_mode = #tpu.pipeline_mode<synchronous>, transform_indices = @transform_1, window_bounds = array<i64: 25, 64>}, {pipeline_mode = #tpu.pipeline_mode<synchronous>, transform_indices = @transform_2, window_bounds = array<i64: 1, 64>}, {pipeline_mode = #tpu.pipeline_mode<synchronous>, transform_indices = @transform_3, window_bounds = array<i64: 64, 32>}, {pipeline_mode = #tpu.pipeline_mode<synchronous>, transform_indices = @transform_4, window_bounds = array<i64: 1, 32>}, {pipeline_mode = #tpu.pipeline_mode<synchronous>, transform_indices = @transform_5, window_bounds = array<i64: 32, 5>}, {pipeline_mode = #tpu.pipeline_mode<synchronous>, transform_indices = @transform_6, window_bounds = array<i64: 1, 5>}, {transform_indices = @transform_7, window_bounds = array<i64: 8, 5>}]} {
    %c0 = arith.constant 0 : index
    %c0_0 = arith.constant 0 : index
    %0 = vector.load %arg1[%c0, %c0_0] : memref<8x25xf32, #tpu.memory_space<vmem>>, vector<8x25xf32>
    %c0_1 = arith.constant 0 : index
    %c0_2 = arith.constant 0 : index
    %1 = vector.load %arg2[%c0_1, %c0_2] : memref<25x64xf32, #tpu.memory_space<vmem>>, vector<25x64xf32>
    %cst = arith.constant dense<0.000000e+00> : vector<8x64xf32>
    %2 = tpu.matmul %0, %1, %cst {dimension_numbers = #tpu.dot_dimension_numbers<[1], [0], [0], [1], [0, 0, 1, 1], [], []>} : vector<8x25xf32>, vector<25x64xf32>, vector<8x64xf32> -> vector<8x64xf32>
    %c0_3 = arith.constant 0 : index
    %c0_4 = arith.constant 0 : index
    %3 = vector.load %arg3[%c0_3, %c0_4] : memref<1x64xf32, #tpu.memory_space<vmem>>, vector<1x64xf32>
    %4 = vector.broadcast %3 : vector<1x64xf32> to vector<8x64xf32>
    %5 = arith.addf %2, %4 : vector<8x64xf32>
    %cst_5 = arith.constant 0.000000e+00 : f32
    %6 = vector.broadcast %cst_5 : f32 to vector<8x64xf32>
    %7 = arith.maximumf %5, %6 : vector<8x64xf32>
    %c0_6 = arith.constant 0 : index
    %c0_7 = arith.constant 0 : index
    %8 = vector.load %arg4[%c0_6, %c0_7] : memref<64x32xf32, #tpu.memory_space<vmem>>, vector<64x32xf32>
    %cst_8 = arith.constant dense<0.000000e+00> : vector<8x32xf32>
    %9 = tpu.matmul %7, %8, %cst_8 {dimension_numbers = #tpu.dot_dimension_numbers<[1], [0], [0], [1], [0, 0, 1, 1], [], []>} : vector<8x64xf32>, vector<64x32xf32>, vector<8x32xf32> -> vector<8x32xf32>
    %c0_9 = arith.constant 0 : index
    %c0_10 = arith.constant 0 : index
    %10 = vector.load %arg5[%c0_9, %c0_10] : memref<1x32xf32, #tpu.memory_space<vmem>>, vector<1x32xf32>
    %11 = vector.broadcast %10 : vector<1x32xf32> to vector<8x32xf32>
    %12 = arith.addf %9, %11 : vector<8x32xf32>
    %cst_11 = arith.constant 0.000000e+00 : f32
    %13 = vector.broadcast %cst_11 : f32 to vector<8x32xf32>
    %14 = arith.maximumf %12, %13 : vector<8x32xf32>
    %c0_12 = arith.constant 0 : index
    %c0_13 = arith.constant 0 : index
    %15 = vector.load %arg6[%c0_12, %c0_13] : memref<32x5xf32, #tpu.memory_space<vmem>>, vector<32x5xf32>
    %cst_14 = arith.constant dense<0.000000e+00> : vector<8x5xf32>
    %16 = tpu.matmul %14, %15, %cst_14 {dimension_numbers = #tpu.dot_dimension_numbers<[1], [0], [0], [1], [0, 0, 1, 1], [], []>} : vector<8x32xf32>, vector<32x5xf32>, vector<8x5xf32> -> vector<8x5xf32>
    %c0_15 = arith.constant 0 : index
    %c0_16 = arith.constant 0 : index
    %17 = vector.load %arg7[%c0_15, %c0_16] : memref<1x5xf32, #tpu.memory_space<vmem>>, vector<1x5xf32>
    %18 = vector.broadcast %17 : vector<1x5xf32> to vector<8x5xf32>
    %19 = arith.addf %16, %18 : vector<8x5xf32>
    %20 = math.tanh %19 : vector<8x5xf32>
    %cst_17 = arith.constant 5.000000e+00 : f32
    %21 = vector.broadcast %cst_17 : f32 to vector<8x5xf32>
    %22 = arith.mulf %20, %21 : vector<8x5xf32>
    %cst_18 = arith.constant dense<0xFF800000> : vector<8xf32>
    %23 = vector.multi_reduction <maximumf>, %22, %cst_18 [1] : vector<8x5xf32> to vector<8xf32>
    %24 = vector.shape_cast %23 : vector<8xf32> to vector<8x1xf32>
    %25 = vector.broadcast %24 : vector<8x1xf32> to vector<8x5xf32>
    %26 = arith.subf %22, %25 : vector<8x5xf32>
    %27 = math.exp %26 : vector<8x5xf32>
    %cst_19 = arith.constant dense<0.000000e+00> : vector<8xf32>
    %28 = vector.multi_reduction <add>, %27, %cst_19 [1] : vector<8x5xf32> to vector<8xf32>
    %29 = vector.shape_cast %28 : vector<8xf32> to vector<8x1xf32>
    %30 = vector.broadcast %29 : vector<8x1xf32> to vector<8x5xf32>
    %31 = arith.divf %27, %30 : vector<8x5xf32>
    %c0_20 = arith.constant 0 : index
    %c0_21 = arith.constant 0 : index
    %32 = vector.load %arg8[%c0_20, %c0_21] : memref<8x5xf32, #tpu.memory_space<vmem>>, vector<8x5xf32>
    tpu.vector_store %arg8[%c0_20, %c0_21], %31 {strides = array<i32>} : memref<8x5xf32, #tpu.memory_space<vmem>>, vector<8x5xf32>,
    return
  }
  func.func @transform_0(%arg0: i32) -> (i32, i32) {
    %c0_i32 = arith.constant 0 : i32
    %c0_i32_0 = arith.constant 0 : i32
    return %arg0, %c0_i32 : i32, i32
  }
  func.func @transform_1(%arg0: i32) -> (i32, i32) {
    %c0_i32 = arith.constant 0 : i32
    %c0_i32_0 = arith.constant 0 : i32
    %c0_i32_1 = arith.constant 0 : i32
    return %c0_i32, %c0_i32_0 : i32, i32
  }
  func.func @transform_2(%arg0: i32) -> (i32, i32) {
    %c0_i32 = arith.constant 0 : i32
    %c0_i32_0 = arith.constant 0 : i32
    %c0_i32_1 = arith.constant 0 : i32
    return %c0_i32, %c0_i32_0 : i32, i32
  }
  func.func @transform_3(%arg0: i32) -> (i32, i32) {
    %c0_i32 = arith.constant 0 : i32
    %c0_i32_0 = arith.constant 0 : i32
    %c0_i32_1 = arith.constant 0 : i32
    return %c0_i32, %c0_i32_0 : i32, i32
  }
  func.func @transform_4(%arg0: i32) -> (i32, i32) {
    %c0_i32 = arith.constant 0 : i32
    %c0_i32_0 = arith.constant 0 : i32
    %c0_i32_1 = arith.constant 0 : i32
    return %c0_i32, %c0_i32_0 : i32, i32
  }
  func.func @transform_5(%arg0: i32) -> (i32, i32) {
    %c0_i32 = arith.constant 0 : i32
    %c0_i32_0 = arith.constant 0 : i32
    %c0_i32_1 = arith.constant 0 : i32
    return %c0_i32, %c0_i32_0 : i32, i32
  }
  func.func @transform_6(%arg0: i32) -> (i32, i32) {
    %c0_i32 = arith.constant 0 : i32
    %c0_i32_0 = arith.constant 0 : i32
    %c0_i32_1 = arith.constant 0 : i32
    return %c0_i32, %c0_i32_0 : i32, i32
  }
  func.func @transform_7(%arg0: i32) -> (i32, i32) {
    %c0_i32 = arith.constant 0 : i32
    %c0_i32_0 = arith.constant 0 : i32
    return %arg0, %c0_i32 : i32, i32
  }
}

</mosaic_0001>

<llo_original>
// kernel: tpu_custom_call.1
$region0: #{tpu_custom_call.1}
  #allocation0 [shape = 'u32[]', space=smem, size = 0x4, offset = 0x4, fixed_abs, tag = 'smem constant byte address 0x4 - core index']
  #allocation1 [shape = 'u32[144,128]{1,0:T(1,128)}', space=vmem, size = 0x12000, scoped, tag = 'internal scratch']
  %s0 = inlined_call_operand.vmem [shape: f32[8,25], index: 0, kind: input, shape index: {}]
  %s1 = inlined_call_operand.vmem [shape: f32[25,64], index: 1, kind: input, shape index: {}]
  %s2 = inlined_call_operand.vmem [shape: f32[1,64], index: 2, kind: input, shape index: {}]
  %s3 = inlined_call_operand.vmem [shape: f32[64,32], index: 3, kind: input, shape index: {}]
  %s4 = inlined_call_operand.vmem [shape: f32[1,32], index: 4, kind: input, shape index: {}]
  %s5 = inlined_call_operand.vmem [shape: f32[32,5], index: 5, kind: input, shape index: {}]
  %s6 = inlined_call_operand.vmem [shape: f32[1,5], index: 6, kind: input, shape index: {}]
  %s7 = inlined_call_operand.hbm [shape: f32[8,5], index: 7, kind: output, shape index: {}]
  %s8 = sld [smem:[#allocation0]]
  $region38: #{tpu_custom_call.1} parent=0
    _
  %s10 = ssub.s32 1, %s8
  %s11 = scalar_select 0, %s10, %s8
  $region1: #{tpu_custom_call.1} parent=0
    #allocation2 [shape = 'u8[4096]{0}', space=vmem, size = 0x1000, scoped, tag = 'output window, operand 0, single buffered']
    #allocation3 [shape = 's32[1]{0}', space=sflag, size = 0x4, scoped, tag = 'scoped memory for tpu_custom_call.1']
    %12 = vsyncpa [#allocation3], 0
    // Predicated region
    $region2: #{tpu_custom_call.1} parent=1 // pred_check
      _
    $region3: #{tpu_custom_call.1} parent=1 // pred_check_branch
      %14 = sbr.rel (0) target = $region5
    $region4: #{tpu_custom_call.1} parent=1 // pred_region
      _
    $region5: #{tpu_custom_call.1} parent=1 // pred_fallthru
      _
    // Predicated region
    $region6: #{tpu_custom_call.1} parent=1 // pred_check
      _
    $region7: #{tpu_custom_call.1} parent=1 // pred_check_branch
      %16 = sbr.rel (0) target = $region9
    $region8: #{tpu_custom_call.1} parent=1 // pred_region
      _
    $region9: #{tpu_custom_call.1} parent=1 // pred_fallthru
      _
    // Predicated region
    $region10: #{tpu_custom_call.1} parent=1 // pred_check
      _
    $region11: #{tpu_custom_call.1} parent=1 // pred_check_branch
      %18 = sbr.rel (0) target = $region13
    $region12: #{tpu_custom_call.1} parent=1 // pred_region
      _
    $region13: #{tpu_custom_call.1} parent=1 // pred_fallthru
      _
    // Predicated region
    $region14: #{tpu_custom_call.1} parent=1 // pred_check
      _
    $region15: #{tpu_custom_call.1} parent=1 // pred_check_branch
      %20 = sbr.rel (0) target = $region17
    $region16: #{tpu_custom_call.1} parent=1 // pred_region
      _
    $region17: #{tpu_custom_call.1} parent=1 // pred_fallthru
      _
    // Predicated region
    $region18: #{tpu_custom_call.1} parent=1 // pred_check
      _
    $region19: #{tpu_custom_call.1} parent=1 // pred_check_branch
      %22 = sbr.rel (0) target = $region21
    $region20: #{tpu_custom_call.1} parent=1 // pred_region
      _
    $region21: #{tpu_custom_call.1} parent=1 // pred_fallthru
      _
    // Predicated region
    $region22: #{tpu_custom_call.1} parent=1 // pred_check
      _
    $region23: #{tpu_custom_call.1} parent=1 // pred_check_branch
      %24 = sbr.rel (0) target = $region25
    $region24: #{tpu_custom_call.1} parent=1 // pred_region
      _
    $region25: #{tpu_custom_call.1} parent=1 // pred_fallthru
      _
    // Predicated region
    $region26: #{tpu_custom_call.1} parent=1 // pred_check
      _
    $region27: #{tpu_custom_call.1} parent=1 // pred_check_branch
      %26 = sbr.rel (0) target = $region29
    $region28: #{tpu_custom_call.1} parent=1 // pred_region
      _
    $region29: #{tpu_custom_call.1} parent=1 // pred_fallthru
      _
    %v27 = vld [vmem:[%s0] sm:$0xff]
    %v28 = vld [vmem:[%s1] sm:$0xff]
    %v29 = vld [vmem:[%s1 + $0x8] sm:$0xff]
    %v30 = vld [vmem:[%s1 + $0x10] sm:$0xff]
    %v31 = vld [vmem:[%s1 + $0x18] sm:$0x1]
    %v32 = vld [vmem:[%s2] sm:$0x1]
    %v34 = vlaneseq
    %v35 = vshrl.u32 %v34, 7
    %v36 = vsub.s32 0, %v35
    %v37 = vrot.slane %v32, %v36
    %vm39 = vcmask 203776
    %v41 = vsel %vm39, %v27, 0
    %vm43 = vcmask 1040384
    %v45 = vsel %vm43, %v31, 0
    %47 = vmatprep.subr.mxu0 0.0
    %48 = vmatpush1.msra.mxu0 %v28
    %49 = vmatprep.subr.mxu0 0.0
    %50 = vmatpush1.msra.mxu0 %v29
    %51 = vmatprep.subr.mxu0 0.0
    %52 = vmatpush1.msra.mxu0 %v30
    %53 = vmatprep.subr.mxu0 0.0
    %54 = vmatpush1.msra.mxu0 %v45
    %55 = vmatprep.subr.mxu0 0.0
    %56 = vmatpush1.msra.mxu0 0.0
    %57 = vmatprep.subr.mxu0 0.0
    %58 = vmatpush1.msra.mxu0 0.0
    %59 = vmatprep.subr.mxu0 0.0
    %60 = vmatpush1.msra.mxu0 0.0
    %61 = vmatprep.subr.mxu0 0.0
    %62 = vmatpush1.msra.mxu0 0.0
    %63 = vmatprep.subr.mxu0 0.0
    %64 = vmatpush1.msra.mxu0 0.0
    %65 = vmatprep.subr.mxu0 0.0
    %66 = vmatpush1.msra.mxu0 0.0
    %67 = vmatprep.subr.mxu0 0.0
    %68 = vmatpush1.msra.mxu0 0.0
    %69 = vmatprep.subr.mxu0 0.0
    %70 = vmatpush1.msra.mxu0 0.0
    %71 = vmatprep.subr.mxu0 0.0
    %72 = vmatpush1.msra.mxu0 0.0
    %73 = vmatprep.subr.mxu0 0.0
    %74 = vmatpush1.msra.mxu0 0.0
    %75 = vmatprep.subr.mxu0 0.0
    %76 = vmatpush1.msra.mxu0 0.0
    %77 = vmatprep.subr.mxu0 0.0
    %78 = vmatpush1.msra.mxu0 0.0
    %79 = vmatprep.subr.mxu0 0.0
    %80 = vmatpush1.msra.mxu0 0.0
    %81 = vmatprep.subr.mxu0 0.0
    %82 = vmatpush1.msra.mxu0 0.0
    %83 = vmatprep.subr.mxu0 0.0
    %84 = vmatpush1.msra.mxu0 0.0
    %85 = vmatprep.subr.mxu0 0.0
    %86 = vmatpush1.msra.mxu0 0.0
    %87 = vmatprep.subr.mxu0 0.0
    %88 = vmatpush1.msra.mxu0 0.0
    %89 = vmatprep.subr.mxu0 0.0
    %90 = vmatpush1.msra.mxu0 0.0
    %91 = vmatprep.subr.mxu0 0.0
    %92 = vmatpush1.msra.mxu0 0.0
    %93 = vmatprep.subr.mxu0 0.0
    %94 = vmatpush1.msra.mxu0 0.0
    %95 = vmatprep.subr.mxu0 0.0
    %96 = vmatpush1.msra.mxu0 0.0
    %97 = vmatprep.subr.mxu0 0.0
    %98 = vmatpush1.msra.mxu0 0.0
    %99 = vmatprep.subr.mxu0 0.0
    %100 = vmatpush1.msra.mxu0 0.0
    %101 = vmatprep.subr.mxu0 0.0
    %102 = vmatpush1.msra.mxu0 0.0
    %103 = vmatprep.subr.mxu0 0.0
    %104 = vmatpush1.msra.mxu0 0.0
    %105 = vmatprep.subr.mxu0 0.0
    %106 = vmatpush1.msra.mxu0 0.0
    %107 = vmatprep.subr.mxu0 0.0
    %108 = vmatpush1.msra.mxu0 0.0
    %109 = vmatprep.subr.mxu0 0.0
    %110 = vmatpush1.msra.mxu0 0.0
    %111 = vmatprep.mubr.f32.mxu0 0.0
    %112 = vmatmul.mubr.f32.gmra.mrb[0].mxu0 %v41
    %v113 = vpop.f32.mrb[0].mxu0
    %v114 = vadd.f32 %v37, %v113
    %v115 = vpop.f32.mrb[0].mxu0
    %116 = vdwg.mxu0
    %v117 = vmax.f32 %v114, 0.0
    %v118 = vld [vmem:[%s3] sm:$0xff]
    %v119 = vld [vmem:[%s3 + $0x8] sm:$0xff]
    %v120 = vld [vmem:[%s3 + $0x10] sm:$0xff]
    %v121 = vld [vmem:[%s3 + $0x18] sm:$0xff]
    %v122 = vld [vmem:[%s3 + $0x20] sm:$0xff]
    %v123 = vld [vmem:[%s3 + $0x28] sm:$0xff]
    %v124 = vld [vmem:[%s3 + $0x30] sm:$0xff]
    %v125 = vld [vmem:[%s3 + $0x38] sm:$0xff]
    %v126 = vld [vmem:[%s4] sm:$0x1]
    %v128 = vlaneseq
    %v129 = vshrl.u32 %v128, 7
    %v130 = vsub.s32 0, %v129
    %v131 = vrot.slane %v126, %v130
    %vm133 = vcmask 523264
    %v135 = vsel %vm133, %v117, 0
    %137 = vmatprep.subr.mxu0 0.0
    %138 = vmatpush1.msra.mxu0 %v118
    %139 = vmatprep.subr.mxu0 0.0
    %140 = vmatpush1.msra.mxu0 %v119
    %141 = vmatprep.subr.mxu0 0.0
    %142 = vmatpush1.msra.mxu0 %v120
    %143 = vmatprep.subr.mxu0 0.0
    %144 = vmatpush1.msra.mxu0 %v121
    %145 = vmatprep.subr.mxu0 0.0
    %146 = vmatpush1.msra.mxu0 %v122
    %147 = vmatprep.subr.mxu0 0.0
    %148 = vmatpush1.msra.mxu0 %v123
    %149 = vmatprep.subr.mxu0 0.0
    %150 = vmatpush1.msra.mxu0 %v124
    %151 = vmatprep.subr.mxu0 0.0
    %152 = vmatpush1.msra.mxu0 %v125
    %153 = vmatprep.subr.mxu0 0.0
    %154 = vmatpush1.msra.mxu0 0.0
    %155 = vmatprep.subr.mxu0 0.0
    %156 = vmatpush1.msra.mxu0 0.0
    %157 = vmatprep.subr.mxu0 0.0
    %158 = vmatpush1.msra.mxu0 0.0
    %159 = vmatprep.subr.mxu0 0.0
    %160 = vmatpush1.msra.mxu0 0.0
    %161 = vmatprep.subr.mxu0 0.0
    %162 = vmatpush1.msra.mxu0 0.0
    %163 = vmatprep.subr.mxu0 0.0
    %164 = vmatpush1.msra.mxu0 0.0
    %165 = vmatprep.subr.mxu0 0.0
    %166 = vmatpush1.msra.mxu0 0.0
    %167 = vmatprep.subr.mxu0 0.0
    %168 = vmatpush1.msra.mxu0 0.0
    %169 = vmatprep.subr.mxu0 0.0
    %170 = vmatpush1.msra.mxu0 0.0
    %171 = vmatprep.subr.mxu0 0.0
    %172 = vmatpush1.msra.mxu0 0.0
    %173 = vmatprep.subr.mxu0 0.0
    %174 = vmatpush1.msra.mxu0 0.0
    %175 = vmatprep.subr.mxu0 0.0
    %176 = vmatpush1.msra.mxu0 0.0
    %177 = vmatprep.subr.mxu0 0.0
    %178 = vmatpush1.msra.mxu0 0.0
    %179 = vmatprep.subr.mxu0 0.0
    %180 = vmatpush1.msra.mxu0 0.0
    %181 = vmatprep.subr.mxu0 0.0
    %182 = vmatpush1.msra.mxu0 0.0
    %183 = vmatprep.subr.mxu0 0.0
    %184 = vmatpush1.msra.mxu0 0.0
    %185 = vmatprep.subr.mxu0 0.0
    %186 = vmatpush1.msra.mxu0 0.0
    %187 = vmatprep.subr.mxu0 0.0
    %188 = vmatpush1.msra.mxu0 0.0
    %189 = vmatprep.subr.mxu0 0.0
    %190 = vmatpush1.msra.mxu0 0.0
    %191 = vmatprep.subr.mxu0 0.0
    %192 = vmatpush1.msra.mxu0 0.0
    %193 = vmatprep.subr.mxu0 0.0
    %194 = vmatpush1.msra.mxu0 0.0
    %195 = vmatprep.subr.mxu0 0.0
    %196 = vmatpush1.msra.mxu0 0.0
    %197 = vmatprep.subr.mxu0 0.0
    %198 = vmatpush1.msra.mxu0 0.0
    %199 = vmatprep.subr.mxu0 0.0
    %200 = vmatpush1.msra.mxu0 0.0
    %201 = vmatprep.mubr.f32.mxu0 0.0
    %202 = vmatmul.mubr.f32.gmra.mrb[0].mxu0 %v135
    %v203 = vpop.f32.mrb[0].mxu0
    %v204 = vadd.f32 %v131, %v203
    %v205 = vpop.f32.mrb[0].mxu0
    %206 = vdwg.mxu0
    %v207 = vmax.f32 %v204, 0.0
    %v208 = vld [vmem:[%s5] sm:$0xff]
    %v209 = vld [vmem:[%s5 + $0x8] sm:$0xff]
    %v210 = vld [vmem:[%s5 + $0x10] sm:$0xff]
    %v211 = vld [vmem:[%s5 + $0x18] sm:$0xff]
    %v212 = vld [vmem:[%s6] sm:$0x1]
    %v214 = vlaneseq
    %v215 = vshrl.u32 %v214, 7
    %v216 = vsub.s32 0, %v215
    %v217 = vrot.slane %v212, %v216
    %vm219 = vcmask 261120
    %v221 = vsel %vm219, %v207, 0
    %223 = vmatprep.subr.mxu0 0.0
    %224 = vmatpush1.msra.mxu0 %v208
    %225 = vmatprep.subr.mxu0 0.0
    %226 = vmatpush1.msra.mxu0 %v209
    %227 = vmatprep.subr.mxu0 0.0
    %228 = vmatpush1.msra.mxu0 %v210
    %229 = vmatprep.subr.mxu0 0.0
    %230 = vmatpush1.msra.mxu0 %v211
    %231 = vmatprep.subr.mxu0 0.0
    %232 = vmatpush1.msra.mxu0 0.0
    %233 = vmatprep.subr.mxu0 0.0
    %234 = vmatpush1.msra.mxu0 0.0
    %235 = vmatprep.subr.mxu0 0.0
    %236 = vmatpush1.msra.mxu0 0.0
    %237 = vmatprep.subr.mxu0 0.0
    %238 = vmatpush1.msra.mxu0 0.0
    %239 = vmatprep.subr.mxu0 0.0
    %240 = vmatpush1.msra.mxu0 0.0
    %241 = vmatprep.subr.mxu0 0.0
    %242 = vmatpush1.msra.mxu0 0.0
    %243 = vmatprep.subr.mxu0 0.0
    %244 = vmatpush1.msra.mxu0 0.0
    %245 = vmatprep.subr.mxu0 0.0
    %246 = vmatpush1.msra.mxu0 0.0
    %247 = vmatprep.subr.mxu0 0.0
    %248 = vmatpush1.msra.mxu0 0.0
    %249 = vmatprep.subr.mxu0 0.0
    %250 = vmatpush1.msra.mxu0 0.0
    %251 = vmatprep.subr.mxu0 0.0
    %252 = vmatpush1.msra.mxu0 0.0
    %253 = vmatprep.subr.mxu0 0.0
    %254 = vmatpush1.msra.mxu0 0.0
    %255 = vmatprep.subr.mxu0 0.0
    %256 = vmatpush1.msra.mxu0 0.0
    %257 = vmatprep.subr.mxu0 0.0
    %258 = vmatpush1.msra.mxu0 0.0
    %259 = vmatprep.subr.mxu0 0.0
    %260 = vmatpush1.msra.mxu0 0.0
    %261 = vmatprep.subr.mxu0 0.0
    %262 = vmatpush1.msra.mxu0 0.0
    %263 = vmatprep.subr.mxu0 0.0
    %264 = vmatpush1.msra.mxu0 0.0
    %265 = vmatprep.subr.mxu0 0.0
    %266 = vmatpush1.msra.mxu0 0.0
    %267 = vmatprep.subr.mxu0 0.0
    %268 = vmatpush1.msra.mxu0 0.0
    %269 = vmatprep.subr.mxu0 0.0
    %270 = vmatpush1.msra.mxu0 0.0
    %271 = vmatprep.subr.mxu0 0.0
    %272 = vmatpush1.msra.mxu0 0.0
    %273 = vmatprep.subr.mxu0 0.0
    %274 = vmatpush1.msra.mxu0 0.0
    %275 = vmatprep.subr.mxu0 0.0
    %276 = vmatpush1.msra.mxu0 0.0
    %277 = vmatprep.subr.mxu0 0.0
    %278 = vmatpush1.msra.mxu0 0.0
    %279 = vmatprep.subr.mxu0 0.0
    %280 = vmatpush1.msra.mxu0 0.0
    %281 = vmatprep.subr.mxu0 0.0
    %282 = vmatpush1.msra.mxu0 0.0
    %283 = vmatprep.subr.mxu0 0.0
    %284 = vmatpush1.msra.mxu0 0.0
    %285 = vmatprep.subr.mxu0 0.0
    %286 = vmatpush1.msra.mxu0 0.0
    %287 = vmatprep.mubr.f32.mxu0 0.0
    %288 = vmatmul.mubr.f32.gmra.mrb[0].mxu0 %v221
    %v289 = vpop.f32.mrb[0].mxu0
    %v290 = vadd.f32 %v217, %v289
    %v291 = vpop.f32.mrb[0].mxu0
    %292 = vdwg.mxu0
    %v293 = vtanh.pop %v290
    %v294 = vmul.f32 %v293, 5.0
    %vm295 = vcmask 39936
    %v296 = vsel %vm295, %v294, -inf
    %297 = vmax.xlane.f32.xlu0 %v296
    %v298 = vpop.xlane.xlu0 %297
    %v299 = vsub.f32 %v294, %v298
    %v300 = vmul.f32 %v299, 1.442695
    %v301 = vpow.pop %v300
    %v302 = vsel %vm295, %v301, 0.0
    %303 = vadd.xlane.f32.xlu0 %v302
    %v304 = vpop.xlane.xlu0 %303
    %v305 = vrcp.pop %v304
    %v306 = vmul.f32 %v301, %v305
    %307 = vst.msk [vmem:[#allocation2] sm:$0xff] %vm295, %v306
    // Predicated region
    $region30: #{tpu_custom_call.1} parent=1 // pred_check
      _
    $region31: #{tpu_custom_call.1} parent=1 // pred_check_branch
      %309 = sbr.rel (0) target = $region33
    $region32: #{tpu_custom_call.1} parent=1 // pred_region
      %s311 = ssub.s32 128, 128
      %312 = vsyncadd [#allocation3], %s311
      %s314 = sshll.u32 [#allocation2], 4
      %s315 = int_to_ptr.vmem [resolvable:$true] %s314
      %317 = dma.vmem_to_hbm [thread:$0]  %s315, 128, %s7, [#allocation3]
    $region33: #{tpu_custom_call.1} parent=1 // pred_fallthru
      _
    // Predicated region
    $region34: #{tpu_custom_call.1} parent=1 // pred_check
      _
    $region35: #{tpu_custom_call.1} parent=1 // pred_check_branch
      %319 = sbr.rel (0) target = $region37
    $region36: #{tpu_custom_call.1} parent=1 // pred_region
      %320 = dma.done [#allocation3], 128
    $region37: #{tpu_custom_call.1} parent=1 // pred_fallthru
      _
    %321 = vsyncpa [#allocation3], 1

</llo_original>
